<compile_context>
chip_gen: v5e
topology: v5e:2x2
jax: 0.10.0
libtpu: 0.0.40
codegen_flags: <defaults>
</compile_context>

<pallas_src>
import jax
import jax.numpy as jnp
from jax.experimental import pallas as pl
from jax.experimental.pallas import tpu as pltpu


# --------------------------------------------------------------------------- #
# Kernels
# --------------------------------------------------------------------------- #
def linear1_relu_kernel(x_ref, w1_ref, b1_ref, h_ref, acc_ref):
    """One (batch-tile, hidden-tile, K-tile) step of Linear1 + bias + ReLU.

    x_ref  : (TB, TK) bf16   pooled + flattened activation tile
    w1_ref : (TK, TH) bf16   first Linear weight tile (streamed over K)
    b1_ref : (1, TH)  f32
    h_ref  : (TB, TH) f32    ReLU(x @ w1 + b1) output tile
    acc_ref: (TB, TH) f32    VMEM accumulator, persists across K steps
    """
    k = pl.program_id(2)

    @pl.when(k == 0)
    def _init():
        acc_ref[...] = jnp.zeros_like(acc_ref)

    # bf16 x bf16 -> f32 accumulate on the MXU.
    acc_ref[...] += jnp.dot(x_ref[...], w1_ref[...],
                            preferred_element_type=jnp.float32)

    @pl.when(k == pl.num_programs(2) - 1)
    def _finalize():
        h_ref[...] = jnp.maximum(acc_ref[...] + b1_ref[...], 0.0).astype(
            h_ref.dtype)


def head_kernel(h_ref, w2_ref, b2_ref, o_ref):
    """Tiny epilogue: Linear(1024, NC) + LogSoftmax(dim=1)."""
    logits = jnp.dot(h_ref[...], w2_ref[...],
                     preferred_element_type=jnp.float32) + b2_ref[...]
    m = jnp.max(logits, axis=-1, keepdims=True)
    s = logits - m
    lse = jnp.log(jnp.sum(jnp.exp(s), axis=-1, keepdims=True))
    o_ref[...] = (s - lse).astype(o_ref.dtype)


# --------------------------------------------------------------------------- #
# Parameter init (w1 padded + bf16-cast ONCE here, never in the forward)
# --------------------------------------------------------------------------- #
def init_params(key, in_features, hidden=1024, num_classes=2, *, k_align=512):
    """PyTorch-default-style init (uniform +/- 1/sqrt(fan_in)).

    Weights are stored transposed vs. torch ((in, out) instead of (out, in)),
    semantically identical for y = x @ W + b.  w1 dominates HBM traffic: it is
    zero-padded along the feature axis to a lane-friendly multiple of `k_align`
    and cast to bf16 exactly once, so the forward never copies it again.
    """
    k1, k2, k3, k4 = jax.random.split(key, 4)
    lim1 = 1.0 / jnp.sqrt(jnp.float32(in_features))
    w1 = jax.random.uniform(k1, (in_features, hidden), jnp.float32, -lim1, lim1)
    b1 = jax.random.uniform(k2, (1, hidden), jnp.float32, -lim1, lim1)
    lim2 = 1.0 / jnp.sqrt(jnp.float32(hidden))
    w2 = jax.random.uniform(k3, (hidden, num_classes), jnp.float32, -lim2, lim2)
    b2 = jax.random.uniform(k4, (1, num_classes), jnp.float32, -lim2, lim2)

    fp = max(k_align, ((in_features + k_align - 1) // k_align) * k_align)
    if fp != in_features:
        # Padded rows are zero -> contribute nothing to the matmul.
        w1 = jnp.pad(w1, ((0, fp - in_features), (0, 0)))
    return w1.astype(jnp.bfloat16), b1, w2, b2


def _vmem_capacity_bytes():
    """Best-effort VMEM capacity query (v5e/v6e: 128 MiB, v7x: 64 MiB/TC)."""
    default = 64 << 20  # conservative fallback (v7x per-TC)
    try:
        info_fn = getattr(pltpu, "get_tpu_info", None)
        if info_fn is None:
            return default
        info = info_fn()
        for attr in ("vmem_capacity_bytes", "vmem_size_bytes", "vmem_bytes"):
            v = getattr(info, attr, None)
            if v:
                return int(v)
    except Exception:
        pass
    return default


# --------------------------------------------------------------------------- #
# Forward
# --------------------------------------------------------------------------- #
def fc_net_forward(x, params, *, tk=None, tb=512, w1_buffers=2):
    """FC_Net.forward: MaxPool3d(2) -> flatten -> Linear/ReLU/Linear/LogSoftmax.

    tk:  K (feature) tile; None -> hardware default (8192 on 128 MiB VMEM
         chips, 4096 on 64 MiB v7x).
    tb:  batch tile (rounded to a multiple of 8).
    w1_buffers: pipeline depth for the w1 stream (3 is a cheap v7x sweep).
    """
    w1, b1, w2, b2 = params
    B, C, D, H, W = x.shape
    Dp, Hp, Wp = D // 2, H // 2, W // 2          # MaxPool3d(2) floors odd dims

    # --- pooling + flatten: fused XLA reduce over a reshaped view (no
    #     materialized 8-D transpose copy); flatten order matches x.view(B,-1).
    xc = x[:, :, :Dp * 2, :Hp * 2, :Wp * 2]
    xp = xc.reshape(B, C, Dp, 2, Hp, 2, Wp, 2).max(axis=(3, 5, 7))
    xf = xp.reshape(B, C * Dp * Hp * Wp).astype(jnp.bfloat16)

    F = xf.shape[1]
    Fp, H1 = w1.shape
    NC = w2.shape[1]
    assert F <= Fp and Fp % 128 == 0, (F, Fp)

    # Pad only the (cheap) activations; w1 was padded once at init.
    if Fp != F:
        xf = jnp.pad(xf, ((0, 0), (0, Fp - F)))

    # --- hardware-aware K tile + explicit VMEM limit ---
    vmem_cap = _vmem_capacity_bytes()
    desired_tk = int(tk) if tk is not None else (
        8192 if vmem_cap >= (100 << 20) else 4096)
    desired_tk = max(128, min(desired_tk, Fp))
    tk_eff = 128
    for cand in range(desired_tk - desired_tk % 128, 127, -128):
        if Fp % cand == 0:
            tk_eff = cand
            break
    nk = Fp // tk_eff

    # --- batch tiling: pad B up to a full sublane group (>= 8) ---
    Bp = max(8, ((B + 7) // 8) * 8)
    tb_eff = min(max(8, (int(tb) // 8) * 8), Bp)
    nb = pl.cdiv(Bp, tb_eff)
    Bp = nb * tb_eff
    if Bp != B:
        xf = jnp.pad(xf, ((0, Bp - B), (0, 0)))

    # --- hidden-dim tiling: keep parallel extent >= 2 when the batch axis
    #     collapses to one tile (so both v7x TensorCores stream w1); with
    #     nb >= 2 use the full hidden dim to avoid re-streaming x.
    if nb >= 2 or H1 % 256 != 0:
        th = H1
    else:
        th = H1 // 2
    nj = H1 // th

    # --- explicit scoped-VMEM budget for the big kernel ---
    need = (max(2, int(w1_buffers)) * tk_eff * th * 2   # streamed w1 (bf16)
            + 2 * tb_eff * tk_eff * 2                    # double-buffered x
            + tb_eff * th * 4                            # f32 accumulator
            + 2 * tb_eff * th * 4                        # double-buffered h out
            + 4 * th * 4)                                # b1 + slack
    vmem_limit = min(int(vmem_cap) * 3 // 4, max(32 << 20, (need * 3) // 2))
    vmem_limit = max(vmem_limit, need + (4 << 20))

    # Optional deeper pipelining on the w1 stream (v7x tweak; default 2 = off).
    w1_spec_kwargs = {}
    if int(w1_buffers) > 2:
        w1_spec_kwargs["pipeline_mode"] = pl.Buffered(int(w1_buffers))
    w1_spec = pl.BlockSpec((tk_eff, th), lambda b, j, k: (k, j),
                           **w1_spec_kwargs)

    cost1 = pl.CostEstimate(
        flops=2 * Bp * Fp * H1,
        transcendentals=0,
        bytes_accessed=nb * Fp * H1 * 2 + nj * Bp * Fp * 2 + Bp * H1 * 4)

    h = pl.pallas_call(
        linear1_relu_kernel,
        out_shape=jax.ShapeDtypeStruct((Bp, H1), jnp.float32),
        grid_spec=pltpu.PrefetchScalarGridSpec(
            num_scalar_prefetch=0,
            grid=(nb, nj, nk),                      # reduction axis innermost
            in_specs=[
                pl.BlockSpec((tb_eff, tk_eff), lambda b, j, k: (b, k)),  # xf
                w1_spec,                                                 # w1
                pl.BlockSpec((1, th), lambda b, j, k: (0, j)),           # b1
            ],
            out_specs=pl.BlockSpec((tb_eff, th), lambda b, j, k: (b, j)),
            scratch_shapes=[pltpu.VMEM((tb_eff, th), jnp.float32)],
        ),
        compiler_params=pltpu.CompilerParams(
            dimension_semantics=("parallel", "parallel", "arbitrary"),
            vmem_limit_bytes=int(vmem_limit),
        ),
        cost_estimate=cost1,
    )(xf, w1, b1)

    cost2 = pl.CostEstimate(
        flops=2 * Bp * H1 * NC + 8 * Bp * NC,
        transcendentals=Bp * NC,
        bytes_accessed=Bp * H1 * 4 + H1 * NC * 4 + Bp * NC * 4)

    out = pl.pallas_call(
        head_kernel,
        out_shape=jax.ShapeDtypeStruct((Bp, NC), jnp.float32),
        grid_spec=pltpu.PrefetchScalarGridSpec(
            num_scalar_prefetch=0,
            grid=(nb,),
            in_specs=[
                pl.BlockSpec((tb_eff, H1), lambda b: (b, 0)),   # h
                pl.BlockSpec((H1, NC), lambda b: (0, 0)),       # w2 (tiny)
                pl.BlockSpec((1, NC), lambda b: (0, 0)),        # b2
            ],
            out_specs=pl.BlockSpec((tb_eff, NC), lambda b: (b, 0)),
        ),
        compiler_params=pltpu.CompilerParams(
            dimension_semantics=("parallel",),
        ),
        cost_estimate=cost2,
    )(h, w2, b2)
    return out[:B]


# --------------------------------------------------------------------------- #
# Pure-JAX reference (mirrors the PyTorch module, same bf16 contract)
# --------------------------------------------------------------------------- #
def reference_forward(x, params):
    w1, b1, w2, b2 = params
    B, C, D, H, W = x.shape
    Dp, Hp, Wp = D // 2, H // 2, W // 2
    xc = x[:, :, :Dp * 2, :Hp * 2, :Wp * 2]
    xp = xc.reshape(B, C, Dp, 2, Hp, 2, Wp, 2).max(axis=(3, 5, 7))
    xf = xp.reshape(B, -1).astype(jnp.bfloat16)
    h = jnp.maximum(
        jnp.dot(xf, w1[:xf.shape[1]], preferred_element_type=jnp.float32) + b1,
        0.0)
    logits = jnp.dot(h, w2, preferred_element_type=jnp.float32) + b2
    return jax.nn.log_softmax(logits, axis=1)


if __name__ == "__main__":
    key = jax.random.PRNGKey(0)
    kx, kp = jax.random.split(key)

    # Small input consistent with the module's forward: (B, C, D, H, W)
    B, C, D, H, W = 2, 1, 16, 16, 16
    x = jax.random.normal(kx, (B, C, D, H, W), dtype=jnp.float32)

    in_features = C * (D // 2) * (H // 2) * (W // 2)   # 512 (scaled-down 50^3)
    params = init_params(kp, in_features, hidden=1024, num_classes=2)

    # tk=256 exercises the K-tiled accumulation (2 K steps); tiny batch also
    # exercises the hidden-dim split (nj=2) and batch padding to 8.
    out = fc_net_forward(x, params, tk=256, tb=128)
    out = jax.block_until_ready(out)

    ref = reference_forward(x, params)
    assert out.shape == (B, 2), out.shape
    assert jnp.allclose(out, ref, atol=1e-3, rtol=1e-3), (out, ref)

    print("KERNEL_OK")
</pallas_src>

<mosaic_0001>
module attributes {stable_mosaic.version = 11 : i64} {
  func.func @linear1_relu_kernel(%arg0: i32, %arg1: i32, %arg2: i32, %arg3: memref<8x256xbf16, #tpu.memory_space<vmem>>, %arg4: memref<256x512xbf16, #tpu.memory_space<vmem>>, %arg5: memref<1x512xf32, #tpu.memory_space<vmem>>, %arg6: memref<8x512xf32, #tpu.memory_space<vmem>>, %arg7: memref<8x512xf32, #tpu.memory_space<vmem>>) attributes {dimension_semantics = [#tpu.dimension_semantics<parallel>, #tpu.dimension_semantics<parallel>, #tpu.dimension_semantics<arbitrary>], iteration_bounds = array<i64: 1, 2, 2>, scalar_prefetch = 0 : i64, scratch_operands = 1 : i64, tpu.core_type = #tpu.core_type<tc>, window_params = [{transform_indices = @transform_0, window_bounds = array<i64: 8, 256>}, {transform_indices = @transform_1, window_bounds = array<i64: 256, 512>}, {transform_indices = @transform_2, window_bounds = array<i64: 1, 512>}, {transform_indices = @transform_3, window_bounds = array<i64: 8, 512>}]} {
    %c0_i32 = arith.constant 0 : i32
    %0 = arith.cmpi eq, %arg2, %c0_i32 : i32
    %1 = arith.extui %0 : i1 to i32
    %c0_i32_0 = arith.constant 0 : i32
    %2 = arith.cmpi ne, %1, %c0_i32_0 : i32
    scf.if %2 {
      %cst_9 = arith.constant 0.000000e+00 : f32
      %12 = vector.broadcast %cst_9 : f32 to vector<8x512xf32>
      %c0_10 = arith.constant 0 : index
      %c0_11 = arith.constant 0 : index
      %13 = vector.load %arg7[%c0_10, %c0_11] : memref<8x512xf32, #tpu.memory_space<vmem>>, vector<8x512xf32>
      tpu.vector_store %arg7[%c0_10, %c0_11], %12 {strides = array<i32>} : memref<8x512xf32, #tpu.memory_space<vmem>>, vector<8x512xf32>,
    } else {
    }
    %c0 = arith.constant 0 : index
    %c0_1 = arith.constant 0 : index
    %3 = vector.load %arg7[%c0, %c0_1] : memref<8x512xf32, #tpu.memory_space<vmem>>, vector<8x512xf32>
    %c0_2 = arith.constant 0 : index
    %c0_3 = arith.constant 0 : index
    %4 = vector.load %arg3[%c0_2, %c0_3] : memref<8x256xbf16, #tpu.memory_space<vmem>>, vector<8x256xbf16>
    %c0_4 = arith.constant 0 : index
    %c0_5 = arith.constant 0 : index
    %5 = vector.load %arg4[%c0_4, %c0_5] : memref<256x512xbf16, #tpu.memory_space<vmem>>, vector<256x512xbf16>
    %cst = arith.constant dense<0.000000e+00> : vector<8x512xf32>
    %6 = tpu.matmul %4, %5, %cst {dimension_numbers = #tpu.dot_dimension_numbers<[1], [0], [0], [1], [0, 0, 1, 1], [], []>} : vector<8x256xbf16>, vector<256x512xbf16>, vector<8x512xf32> -> vector<8x512xf32>
    %7 = arith.addf %3, %6 : vector<8x512xf32>
    %c0_6 = arith.constant 0 : index
    %c0_7 = arith.constant 0 : index
    %8 = vector.load %arg7[%c0_6, %c0_7] : memref<8x512xf32, #tpu.memory_space<vmem>>, vector<8x512xf32>
    tpu.vector_store %arg7[%c0_6, %c0_7], %7 {strides = array<i32>} : memref<8x512xf32, #tpu.memory_space<vmem>>, vector<8x512xf32>,
    %c1_i32 = arith.constant 1 : i32
    %9 = arith.cmpi eq, %arg2, %c1_i32 : i32
    %10 = arith.extui %9 : i1 to i32
    %c0_i32_8 = arith.constant 0 : i32
    %11 = arith.cmpi ne, %10, %c0_i32_8 : i32
    scf.if %11 {
      %c0_9 = arith.constant 0 : index
      %c0_10 = arith.constant 0 : index
      %12 = vector.load %arg7[%c0_9, %c0_10] : memref<8x512xf32, #tpu.memory_space<vmem>>, vector<8x512xf32>
      %c0_11 = arith.constant 0 : index
      %c0_12 = arith.constant 0 : index
      %13 = vector.load %arg5[%c0_11, %c0_12] : memref<1x512xf32, #tpu.memory_space<vmem>>, vector<1x512xf32>
      %14 = vector.broadcast %13 : vector<1x512xf32> to vector<8x512xf32>
      %15 = arith.addf %12, %14 : vector<8x512xf32>
      %cst_13 = arith.constant 0.000000e+00 : f32
      %16 = vector.broadcast %cst_13 : f32 to vector<8x512xf32>
      %17 = arith.maximumf %15, %16 : vector<8x512xf32>
      %c0_14 = arith.constant 0 : index
      %c0_15 = arith.constant 0 : index
      %18 = vector.load %arg6[%c0_14, %c0_15] : memref<8x512xf32, #tpu.memory_space<vmem>>, vector<8x512xf32>
      tpu.vector_store %arg6[%c0_14, %c0_15], %17 {strides = array<i32>} : memref<8x512xf32, #tpu.memory_space<vmem>>, vector<8x512xf32>,
    } else {
    }
    return
  }
  func.func @transform_0(%arg0: i32, %arg1: i32, %arg2: i32) -> (i32, i32) {
    %c0_i32 = arith.constant 0 : i32
    return %arg0, %arg2 : i32, i32
  }
  func.func @transform_1(%arg0: i32, %arg1: i32, %arg2: i32) -> (i32, i32) {
    %c0_i32 = arith.constant 0 : i32
    return %arg2, %arg1 : i32, i32
  }
  func.func @transform_2(%arg0: i32, %arg1: i32, %arg2: i32) -> (i32, i32) {
    %c0_i32 = arith.constant 0 : i32
    %c0_i32_0 = arith.constant 0 : i32
    return %c0_i32, %arg1 : i32, i32
  }
  func.func @transform_3(%arg0: i32, %arg1: i32, %arg2: i32) -> (i32, i32) {
    %c0_i32 = arith.constant 0 : i32
    return %arg0, %arg1 : i32, i32
  }
}

</mosaic_0001>

<llo_original>
// kernel: tpu_custom_call.1
$region0: #{tpu_custom_call.1}
  #allocation0 [shape = 'u32[]', space=smem, size = 0x4, offset = 0x4, fixed_abs, tag = 'smem constant byte address 0x4 - core index']
  #allocation1 [shape = 'u32[72,128]{1,0:T(1,128)}', space=vmem, size = 0x9000, scoped, tag = 'internal scratch']
  #allocation2 [shape = 'f32[8,512]{1,0:T(8,128)}', space=vmem, size = 0x4000, scoped, tag = 'scratch operand']
  %s0 = inlined_call_operand.hbm [shape: bf16[8,512], index: 0, kind: input, shape index: {}]
  %s1 = inlined_call_operand.hbm [shape: bf16[512,1024], index: 1, kind: input, shape index: {}]
  %s2 = inlined_call_operand.hbm [shape: f32[1,1024], index: 2, kind: input, shape index: {}]
  %s3 = inlined_call_operand.hbm [shape: f32[8,1024], index: 3, kind: output, shape index: {}]
  %s4 = sld [smem:[#allocation0]]
  $region65: #{tpu_custom_call.1} parent=0
    _
  %s6 = ssub.s32 1, %s4
  %s7 = scalar_select 0, %s6, %s4
  $region1: #{tpu_custom_call.1} parent=0
    #allocation3 [shape = 'u8[8192]{0}', space=vmem, size = 0x2000, scoped, tag = 'input window, operand 0']
    #allocation4 [shape = 's32[2]{0}', space=sflag, size = 0x8, scoped, tag = 'scoped memory for tpu_custom_call.1']
    #allocation5 [shape = 's32[2]{0}', space=sflag, size = 0x8, scoped, tag = 'scoped memory for tpu_custom_call.1']
    #allocation6 [shape = 'u8[524288]{0}', space=vmem, size = 0x80000, scoped, tag = 'input window, operand 1']
    #allocation7 [shape = 's32[2]{0}', space=sflag, size = 0x8, scoped, tag = 'scoped memory for tpu_custom_call.1']
    #allocation8 [shape = 'u8[4096]{0}', space=vmem, size = 0x1000, scoped, tag = 'input window, operand 2']
    #allocation9 [shape = 'u8[32768]{0}', space=vmem, size = 0x8000, scoped, tag = 'output window, operand 0']
    %8 = vsyncpa [#allocation4], 0
    %s9 = scalar_lea.sflag [#allocation4], 1
    %10 = vsyncpa %s9, 0
    %11 = vsyncpa [#allocation7], 0
    %s12 = scalar_lea.sflag [#allocation7], 1
    %13 = vsyncpa %s12, 0
    %14 = vsyncpa [#allocation5], 0
    %s15 = scalar_lea.sflag [#allocation5], 1
    %16 = vsyncpa %s15, 0
    loop: start=0, step=1, limit=6
    $region2: #{tpu_custom_call.1} parent=1 // loop_pre_header
      _
    $region3: #{tpu_custom_call.1} parent=1 // loop_header
      %s18 = sphi 0, %s22
      %p19 = scmp.ge.s32.totalorder %s18, 6
      %s25 = sphi 0, %s44
      %s26 = sphi 0, %s40
      %s27 = sphi 0, %s36
      %s28 = sphi 0, %s25
      %s29 = sphi 0, %s26
      %s30 = sphi 0, %s27
      %s31 = sphi 0, %s28
      %s32 = sphi 0, %s29
      %s33 = sphi 0, %s30
      %s49 = sphi 0, %s51
      %s52 = sphi 0, %s49
      %s53 = sphi 0, %s52
      %s69 = sphi 0, %s53
      %s77 = sphi 0, %s79
      %s80 = sphi 0, %s77
      %s81 = sphi 0, %s80
      %s97 = sphi 0, %s81
      %s103 = sphi 0, %s105
      %s106 = sphi 0, %s103
      %s107 = sphi 0, %s106
      %s123 = sphi 0, %s107
      %s131 = sphi 0, %s133
      %s134 = sphi 0, %s131
      %s135 = sphi 0, %s134
      %s151 = sphi 0, %s135
    $region4: #{tpu_custom_call.1} parent=1 // loop_header_branch
      %21 = sbr.rel (%p19) target = $region8
    $region5: #{tpu_custom_call.1} parent=1 // loop_body
      %s23 = ssub.s32 %s18, 1
      %s24 = ssub.s32 %s18, 2
      %s34 = sadd.s32 1, %s27
      %p35 = scmp.ge.s32.totalorder %s34, 2
      %s36 = scalar_select %p35, 0, %s34
      %s37 = sadd.s32 1, %s26
      %s38 = scalar_select %p35, %s37, %s26
      %p39 = scmp.ge.s32.totalorder %s38, 2
      %s40 = scalar_select %p39, 0, %s38
      %s41 = sadd.s32 1, %s25
      %s42 = scalar_select %p39, %s41, %s25
      %p43 = scmp.ge.s32.totalorder %s42, 1
      %s44 = scalar_select %p43, 0, %s42
      %s45 = ssub.s32 %s25, %s44
      %s46 = ssub.s32 %s27, %s36
      %s47 = sor.u32 %s45, %s46
      %p48 = scmp.eq.s32.totalorder %s47, 0
      %s50 = sadd.s32 %s49, 1
      %s51 = scalar_select %p48, %s49, %s50
      %p54 = pneg %p48
      %p55 = scmp.eq.s32.totalorder %s18, 3
      %p56 = por %p54, %p55
      %p57 = scmp.ne.s32.totalorder %s49, %s52
      %p58 = scmp.eq.s32.totalorder %s18, 0
      %p59 = por %p57, %p58
      %p60 = scmp.ne.s32.totalorder %s49, %s52
      %p61 = scmp.eq.s32.totalorder %s23, 3
      %p62 = por %p60, %p61
      %p63 = scmp.ne.s32.totalorder %s52, %s53
      %p64 = scmp.eq.s32.totalorder %s23, 0
      %p65 = por %p63, %p64
      %p66 = scmp.ne.s32.totalorder %s52, %s53
      %p67 = scmp.eq.s32.totalorder %s24, 3
      %p68 = por %p66, %p67
      %p70 = scmp.ne.s32.totalorder %s53, %s69
      %p71 = scmp.eq.s32.totalorder %s24, 0
      %p72 = por %p70, %p71
      %s73 = ssub.s32 %s27, %s36
      %s74 = ssub.s32 %s26, %s40
      %s75 = sor.u32 %s73, %s74
      %p76 = scmp.eq.s32.totalorder %s75, 0
      %s78 = sadd.s32 %s77, 1
      %s79 = scalar_select %p76, %s77, %s78
      %p82 = pneg %p76
      %p83 = scmp.eq.s32.totalorder %s18, 3
      %p84 = por %p82, %p83
      %p85 = scmp.ne.s32.totalorder %s77, %s80
      %p86 = scmp.eq.s32.totalorder %s18, 0
      %p87 = por %p85, %p86
      %p88 = scmp.ne.s32.totalorder %s77, %s80
      %p89 = scmp.eq.s32.totalorder %s23, 3
      %p90 = por %p88, %p89
      %p91 = scmp.ne.s32.totalorder %s80, %s81
      %p92 = scmp.eq.s32.totalorder %s23, 0
      %p93 = por %p91, %p92
      %p94 = scmp.ne.s32.totalorder %s80, %s81
      %p95 = scmp.eq.s32.totalorder %s24, 3
      %p96 = por %p94, %p95
      %p98 = scmp.ne.s32.totalorder %s81, %s97
      %p99 = scmp.eq.s32.totalorder %s24, 0
      %p100 = por %p98, %p99
      %s101 = ssub.s32 %s26, %s40
      %p102 = scmp.eq.s32.totalorder %s101, 0
      %s104 = sadd.s32 %s103, 1
      %s105 = scalar_select %p102, %s103, %s104
      %p108 = pneg %p102
      %p109 = scmp.eq.s32.totalorder %s18, 3
      %p110 = por %p108, %p109
      %p111 = scmp.ne.s32.totalorder %s103, %s106
      %p112 = scmp.eq.s32.totalorder %s18, 0
      %p113 = por %p111, %p112
      %p114 = scmp.ne.s32.totalorder %s103, %s106
      %p115 = scmp.eq.s32.totalorder %s23, 3
      %p116 = por %p114, %p115
      %p117 = scmp.ne.s32.totalorder %s106, %s107
      %p118 = scmp.eq.s32.totalorder %s23, 0
      %p119 = por %p117, %p118
      %p120 = scmp.ne.s32.totalorder %s106, %s107
      %p121 = scmp.eq.s32.totalorder %s24, 3
      %p122 = por %p120, %p121
      %p124 = scmp.ne.s32.totalorder %s107, %s123
      %p125 = scmp.eq.s32.totalorder %s24, 0
      %p126 = por %p124, %p125
      %s127 = ssub.s32 %s25, %s44
      %s128 = ssub.s32 %s26, %s40
      %s129 = sor.u32 %s127, %s128
      %p130 = scmp.eq.s32.totalorder %s129, 0
      %s132 = sadd.s32 %s131, 1
      %s133 = scalar_select %p130, %s131, %s132
      %p136 = pneg %p130
      %p137 = scmp.eq.s32.totalorder %s18, 3
      %p138 = por %p136, %p137
      %p139 = scmp.ne.s32.totalorder %s131, %s134
      %p140 = scmp.eq.s32.totalorder %s18, 0
      %p141 = por %p139, %p140
      %p142 = scmp.ne.s32.totalorder %s131, %s134
      %p143 = scmp.eq.s32.totalorder %s23, 3
      %p144 = por %p142, %p143
      %p145 = scmp.ne.s32.totalorder %s134, %s135
      %p146 = scmp.eq.s32.totalorder %s23, 0
      %p147 = por %p145, %p146
      %p148 = scmp.ne.s32.totalorder %s134, %s135
      %p149 = scmp.eq.s32.totalorder %s24, 3
      %p150 = por %p148, %p149
      %p152 = scmp.ne.s32.totalorder %s135, %s151
      %p153 = scmp.eq.s32.totalorder %s24, 0
      %p154 = por %p152, %p153
      %p155 = scmp.le.s32.totalorder 1, %s18
      %p156 = scmp.lt.s32.totalorder %s18, 5
      %p157 = pnand %p155, %p156
      %p158 = pneg %p157
      // Predicated region
      $region9: #{tpu_custom_call.1} parent=5 // pred_check
        _
      $region10: #{tpu_custom_call.1} parent=5 // pred_check_branch
        %160 = sbr.rel (%p157) target = $region12
      $region11: #{tpu_custom_call.1} parent=5 // pred_region
        %s161 = ssub.s32 %s18, 1
      $region12: #{tpu_custom_call.1} parent=5 // pred_fallthru
        _
      %p162 = scmp.lt.s32.totalorder %s18, 4
      // Predicated region
      $region13: #{tpu_custom_call.1} parent=5 // pred_check
        %p163 = pneg %p162
      $region14: #{tpu_custom_call.1} parent=5 // pred_check_branch
        %165 = sbr.rel (%p163) target = $region16
      $region15: #{tpu_custom_call.1} parent=5 // pred_region
        // Predicated region
        $region17: #{tpu_custom_call.1} parent=15 // pred_check
          %p166 = pneg %p59
        $region18: #{tpu_custom_call.1} parent=15 // pred_check_branch
          %168 = sbr.rel (%p166) target = $region20
        $region19: #{tpu_custom_call.1} parent=15 // pred_region
          %s169 = sand.u32 %s49, 1
          %s170 = scalar_lea.sflag [#allocation4], %s169
          %s171 = sand.u32 %s49, 1
          %s172 = smul.addr %s171, 8
          %s173 = scalar_lea.vmem [#allocation3], %s172
          %s174 = smul.u32 2, %s27
          %176 = vsyncadd %s170, 0
          %s177 = smul.addr %s25, 4
          %s178 = sadd.s32 %s174, %s177
          %s179 = smul.addr %s178, 4
          %s180 = scalar_lea.hbm %s0, %s179
          %s182 = sshll.u32 %s180, 4
          %s183 = int_to_ptr.hbm [resolvable:$true] %s182
          %s184 = sshll.u32 %s173, 4
          %s185 = int_to_ptr.vmem [resolvable:$true] %s184
          %187 = dma.hbm_to_vmem [thread:$0]  %s183, 128, %s185, %s170
        $region20: #{tpu_custom_call.1} parent=15 // pred_fallthru
          _
        // Predicated region
        $region21: #{tpu_custom_call.1} parent=15 // pred_check
          %p188 = pneg %p87
        $region22: #{tpu_custom_call.1} parent=15 // pred_check_branch
          %190 = sbr.rel (%p188) target = $region24
        $region23: #{tpu_custom_call.1} parent=15 // pred_region
          %s191 = sand.u32 %s18, 1
          %s192 = scalar_lea.sflag [#allocation7], %s191
          %s193 = sand.u32 %s77, 1
          %s194 = smul.addr %s193, 512
          %s195 = scalar_lea.vmem [#allocation6], %s194
          %s196 = smul.u32 32, %s27
          %s197 = smul.u32 4, %s26
          %199 = vsyncadd %s192, 0
          %s200 = smul.addr %s196, 8
          %s201 = sadd.s32 %s197, %s200
          %s202 = smul.addr %s201, 4
          %s203 = scalar_lea.hbm %s1, %s202
          %s204 = sshll.u32 %s203, 4
          %s205 = int_to_ptr.hbm [resolvable:$true] %s204
          %s206 = sshll.u32 %s195, 4
          %s207 = int_to_ptr.vmem [resolvable:$true] %s206
          %212 = dma.hbm_to_vmem [thread:$0]  %s205, 8192, %s207, %s192, 512, 256, 16
        $region24: #{tpu_custom_call.1} parent=15 // pred_fallthru
          _
        // Predicated region
        $region25: #{tpu_custom_call.1} parent=15 // pred_check
          %p213 = pneg %p113
        $region26: #{tpu_custom_call.1} parent=15 // pred_check_branch
          %215 = sbr.rel (%p213) target = $region28
        $region27: #{tpu_custom_call.1} parent=15 // pred_region
          %s216 = sand.u32 %s18, 1
          %s217 = scalar_lea.sflag [#allocation7], %s216
          %s218 = sand.u32 %s103, 1
          %s219 = smul.addr %s218, 4
          %s220 = scalar_lea.vmem [#allocation8], %s219
          %s221 = smul.u32 4, %s26
          %223 = vsyncadd %s217, 0
          %s224 = scalar_lea.hbm %s2, %s221
          %s226 = sshll.u32 %s224, 4
          %s227 = int_to_ptr.hbm [resolvable:$true] %s226
          %s228 = sshll.u32 %s220, 4
          %s229 = int_to_ptr.vmem [resolvable:$true] %s228
          %231 = dma.hbm_to_vmem [thread:$0]  %s227, 64, %s229, %s217
        $region28: #{tpu_custom_call.1} parent=15 // pred_fallthru
          _
      $region16: #{tpu_custom_call.1} parent=5 // pred_fallthru
        _
      %p232 = scmp.le.s32.totalorder 1, %s18
      %p233 = scmp.lt.s32.totalorder %s18, 5
      %p234 = pnand %p232, %p233
      %p235 = pneg %p234
      // Predicated region
      $region29: #{tpu_custom_call.1} parent=5 // pred_check
        _
      $region30: #{tpu_custom_call.1} parent=5 // pred_check_branch
        %237 = sbr.rel (%p234) target = $region32
      $region31: #{tpu_custom_call.1} parent=5 // pred_region
        %s238 = ssub.s32 %s18, 1
        %s239 = sand.u32 %s52, 1
        %s240 = scalar_lea.sflag [#allocation4], %s239
        %s241 = sand.u32 %s52, 1
        %s242 = smul.addr %s241, 8
        %s243 = scalar_lea.vmem [#allocation3], %s242
        // Predicated region
        $region33: #{tpu_custom_call.1} parent=31 // pred_check
          %p244 = pneg %p65
        $region34: #{tpu_custom_call.1} parent=31 // pred_check_branch
          %246 = sbr.rel (%p244) target = $region36
        $region35: #{tpu_custom_call.1} parent=31 // pred_region
          %248 = dma.done %s240, 128
        $region36: #{tpu_custom_call.1} parent=31 // pred_fallthru
          _
        %s249 = sand.u32 %s23, 1
        %s250 = scalar_lea.sflag [#allocation7], %s249
        %s251 = sand.u32 %s80, 1
        %s252 = smul.addr %s251, 512
        %s253 = scalar_lea.vmem [#allocation6], %s252
        // Predicated region
        $region37: #{tpu_custom_call.1} parent=31 // pred_check
          %p254 = pneg %p93
        $region38: #{tpu_custom_call.1} parent=31 // pred_check_branch
          %256 = sbr.rel (%p254) target = $region40
        $region39: #{tpu_custom_call.1} parent=31 // pred_region
          %258 = dma.done %s250, 8192
        $region40: #{tpu_custom_call.1} parent=31 // pred_fallthru
          _
        %s259 = sand.u32 %s23, 1
        %s260 = scalar_lea.sflag [#allocation7], %s259
        %s261 = sand.u32 %s106, 1
        %s262 = smul.addr %s261, 4
        %s263 = scalar_lea.vmem [#allocation8], %s262
        // Predicated region
        $region41: #{tpu_custom_call.1} parent=31 // pred_check
          %p264 = pneg %p119
        $region42: #{tpu_custom_call.1} parent=31 // pred_check_branch
          %266 = sbr.rel (%p264) target = $region44
        $region43: #{tpu_custom_call.1} parent=31 // pred_region
          %268 = dma.done %s260, 64
        $region44: #{tpu_custom_call.1} parent=31 // pred_fallthru
          _
        %s269 = sand.u32 %s52, 1
        %s270 = scalar_lea.sflag [#allocation4], %s269
        %s271 = sand.u32 %s52, 1
        %s272 = smul.addr %s271, 8
        %s273 = scalar_lea.vmem [#allocation3], %s272
        %p274 = pneg %p65
        %p275 = pneg %p62
        %s276 = sand.u32 %s23, 1
        %s277 = scalar_lea.sflag [#allocation7], %s276
        %s278 = sand.u32 %s80, 1
        %s279 = smul.addr %s278, 512
        %s280 = scalar_lea.vmem [#allocation6], %s279
        %p281 = pneg %p93
        %p282 = pneg %p90
        %s283 = sand.u32 %s23, 1
        %s284 = scalar_lea.sflag [#allocation7], %s283
        %s285 = sand.u32 %s106, 1
        %s286 = smul.addr %s285, 4
        %s287 = scalar_lea.vmem [#allocation8], %s286
        %p288 = pneg %p119
        %p289 = pneg %p116
        %p290 = pneg %p147
        %p291 = pneg %p144
        %s292 = sand.u32 %s134, 1
        %s293 = scalar_lea.sflag [#allocation5], %s292
        %s294 = sand.u32 %s134, 1
        %s295 = smul.addr %s294, 32
        %s296 = scalar_lea.vmem [#allocation9], %s295
        %s297 = smul.u32 2, %s30
        %s298 = smul.u32 32, %s30
        %s299 = smul.u32 4, %s29
        %s300 = smul.u32 4, %s29
        %s301 = smul.u32 4, %s29
        %p302 = scmp.eq.s32.totalorder %s30, 0
        // Predicated region
        $region45: #{tpu_custom_call.1} parent=31 // pred_check
          %p303 = pneg %p302
        $region46: #{tpu_custom_call.1} parent=31 // pred_check_branch
          %305 = sbr.rel (%p303) target = $region48
        $region47: #{tpu_custom_call.1} parent=31 // pred_region
          %306 = vst [vmem:[#allocation2] sm:$0xff] 0.0
          %307 = vst [vmem:[#allocation2 + $0x8] sm:$0xff] 0.0
          %308 = vst [vmem:[#allocation2 + $0x10] sm:$0xff] 0.0
          %309 = vst [vmem:[#allocation2 + $0x18] sm:$0xff] 0.0
        $region48: #{tpu_custom_call.1} parent=31 // pred_fallthru
          _
        %v310 = vld [vmem:[#allocation2] sm:$0xff]
        %v311 = vld [vmem:[#allocation2 + $0x8] sm:$0xff]
        %v312 = vld [vmem:[#allocation2 + $0x10] sm:$0xff]
        %v313 = vld [vmem:[#allocation2 + $0x18] sm:$0xff]
        %v314 = vld [vmem:[%s243] sm:$0xff]
        %v315 = vld [vmem:[%s253] sm:$0xff]
        %v316 = vld [vmem:[%s253 + $0x8] sm:$0xff]
        %v317 = vld [vmem:[%s253 + $0x10] sm:$0xff]
        %v318 = vld [vmem:[%s253 + $0x18] sm:$0xff]
        %v319 = vld [vmem:[%s253 + $0x20] sm:$0xff]
        %v320 = vld [vmem:[%s253 + $0x28] sm:$0xff]
        %v321 = vld [vmem:[%s253 + $0x30] sm:$0xff]
        %v322 = vld [vmem:[%s253 + $0x38] sm:$0xff]
        %v323 = vld [vmem:[%s253 + $0x40] sm:$0xff]
        %v324 = vld [vmem:[%s253 + $0x48] sm:$0xff]
        %v325 = vld [vmem:[%s253 + $0x50] sm:$0xff]
        %v326 = vld [vmem:[%s253 + $0x58] sm:$0xff]
        %v327 = vld [vmem:[%s253 + $0x60] sm:$0xff]
        %v328 = vld [vmem:[%s253 + $0x68] sm:$0xff]
        %v329 = vld [vmem:[%s253 + $0x70] sm:$0xff]
        %v330 = vld [vmem:[%s253 + $0x78] sm:$0xff]
        %v331 = vld [vmem:[%s253 + $0x80] sm:$0xff]
        %v332 = vld [vmem:[%s253 + $0x88] sm:$0xff]
        %v333 = vld [vmem:[%s253 + $0x90] sm:$0xff]
        %v334 = vld [vmem:[%s253 + $0x98] sm:$0xff]
        %v335 = vld [vmem:[%s253 + $0xa0] sm:$0xff]
        %v336 = vld [vmem:[%s253 + $0xa8] sm:$0xff]
        %v337 = vld [vmem:[%s253 + $0xb0] sm:$0xff]
        %v338 = vld [vmem:[%s253 + $0xb8] sm:$0xff]
        %v339 = vld [vmem:[%s253 + $0xc0] sm:$0xff]
        %v340 = vld [vmem:[%s253 + $0xc8] sm:$0xff]
        %v341 = vld [vmem:[%s253 + $0xd0] sm:$0xff]
        %v342 = vld [vmem:[%s253 + $0xd8] sm:$0xff]
        %v343 = vld [vmem:[%s253 + $0xe0] sm:$0xff]
        %v344 = vld [vmem:[%s253 + $0xe8] sm:$0xff]
        %v345 = vld [vmem:[%s253 + $0xf0] sm:$0xff]
        %v346 = vld [vmem:[%s253 + $0xf8] sm:$0xff]
        %v347 = vld [vmem:[%s253 + $0x100] sm:$0xff]
        %v348 = vld [vmem:[%s253 + $0x108] sm:$0xff]
        %v349 = vld [vmem:[%s253 + $0x110] sm:$0xff]
        %v350 = vld [vmem:[%s253 + $0x118] sm:$0xff]
        %v351 = vld [vmem:[%s253 + $0x120] sm:$0xff]
        %v352 = vld [vmem:[%s253 + $0x128] sm:$0xff]
        %v353 = vld [vmem:[%s253 + $0x130] sm:$0xff]
        %v354 = vld [vmem:[%s253 + $0x138] sm:$0xff]
        %v355 = vld [vmem:[%s253 + $0x140] sm:$0xff]
        %v356 = vld [vmem:[%s253 + $0x148] sm:$0xff]
        %v357 = vld [vmem:[%s253 + $0x150] sm:$0xff]
        %v358 = vld [vmem:[%s253 + $0x158] sm:$0xff]
        %v359 = vld [vmem:[%s253 + $0x160] sm:$0xff]
        %v360 = vld [vmem:[%s253 + $0x168] sm:$0xff]
        %v361 = vld [vmem:[%s253 + $0x170] sm:$0xff]
        %v362 = vld [vmem:[%s253 + $0x178] sm:$0xff]
        %v363 = vld [vmem:[%s253 + $0x180] sm:$0xff]
        %v364 = vld [vmem:[%s253 + $0x188] sm:$0xff]
        %v365 = vld [vmem:[%s253 + $0x190] sm:$0xff]
        %v366 = vld [vmem:[%s253 + $0x198] sm:$0xff]
        %v367 = vld [vmem:[%s253 + $0x1a0] sm:$0xff]
        %v368 = vld [vmem:[%s253 + $0x1a8] sm:$0xff]
        %v369 = vld [vmem:[%s253 + $0x1b0] sm:$0xff]
        %v370 = vld [vmem:[%s253 + $0x1b8] sm:$0xff]
        %v371 = vld [vmem:[%s253 + $0x1c0] sm:$0xff]
        %v372 = vld [vmem:[%s253 + $0x1c8] sm:$0xff]
        %v373 = vld [vmem:[%s253 + $0x1d0] sm:$0xff]
        %v374 = vld [vmem:[%s253 + $0x1d8] sm:$0xff]
        %v375 = vld [vmem:[%s253 + $0x1e0] sm:$0xff]
        %v376 = vld [vmem:[%s253 + $0x1e8] sm:$0xff]
        %v377 = vld [vmem:[%s253 + $0x1f0] sm:$0xff]
        %v378 = vld [vmem:[%s253 + $0x1f8] sm:$0xff]
        %v380 = vunpack.c.l.b16 %v314
        %v381 = vunpack.c.h.b16 %v314
        %v382 = vpack.c.b16 %v380, %v380
        %v383 = vpack.c.b16 %v381, %v381
        %v450 = vunpack.c.l.b16 %v315
        %v451 = vunpack.c.h.b16 %v315
        %v452 = vunpack.c.l.b16 %v316
        %v453 = vunpack.c.h.b16 %v316
        %v454 = vunpack.c.l.b16 %v317
        %v455 = vunpack.c.h.b16 %v317
        %v456 = vunpack.c.l.b16 %v318
        %v457 = vunpack.c.h.b16 %v318
        %v458 = vunpack.c.l.b16 %v319
        %v459 = vunpack.c.h.b16 %v319
        %v460 = vunpack.c.l.b16 %v320
        %v461 = vunpack.c.h.b16 %v320
        %v462 = vunpack.c.l.b16 %v321
        %v463 = vunpack.c.h.b16 %v321
        %v464 = vunpack.c.l.b16 %v322
        %v465 = vunpack.c.h.b16 %v322
        %v466 = vunpack.c.l.b16 %v323
        %v467 = vunpack.c.h.b16 %v323
        %v468 = vunpack.c.l.b16 %v324
        %v469 = vunpack.c.h.b16 %v324
        %v470 = vunpack.c.l.b16 %v325
        %v471 = vunpack.c.h.b16 %v325
        %v472 = vunpack.c.l.b16 %v326
        %v473 = vunpack.c.h.b16 %v326
        %v474 = vunpack.c.l.b16 %v327
        %v475 = vunpack.c.h.b16 %v327
        %v476 = vunpack.c.l.b16 %v328
        %v477 = vunpack.c.h.b16 %v328
        %v478 = vunpack.c.l.b16 %v329
        %v479 = vunpack.c.h.b16 %v329
        %v480 = vunpack.c.l.b16 %v330
        %v481 = vunpack.c.h.b16 %v330
        %v482 = vunpack.c.l.b16 %v331
        %v483 = vunpack.c.h.b16 %v331
        %v484 = vunpack.c.l.b16 %v332
        %v485 = vunpack.c.h.b16 %v332
        %v486 = vunpack.c.l.b16 %v333
        %v487 = vunpack.c.h.b16 %v333
        %v488 = vunpack.c.l.b16 %v334
        %v489 = vunpack.c.h.b16 %v334
        %v490 = vunpack.c.l.b16 %v335
        %v491 = vunpack.c.h.b16 %v335
        %v492 = vunpack.c.l.b16 %v336
        %v493 = vunpack.c.h.b16 %v336
        %v494 = vunpack.c.l.b16 %v337
        %v495 = vunpack.c.h.b16 %v337
        %v496 = vunpack.c.l.b16 %v338
        %v497 = vunpack.c.h.b16 %v338
        %v498 = vunpack.c.l.b16 %v339
        %v499 = vunpack.c.h.b16 %v339
        %v500 = vunpack.c.l.b16 %v340
        %v501 = vunpack.c.h.b16 %v340
        %v502 = vunpack.c.l.b16 %v341
        %v503 = vunpack.c.h.b16 %v341
        %v504 = vunpack.c.l.b16 %v342
        %v505 = vunpack.c.h.b16 %v342
        %v506 = vunpack.c.l.b16 %v343
        %v507 = vunpack.c.h.b16 %v343
        %v508 = vunpack.c.l.b16 %v344
        %v509 = vunpack.c.h.b16 %v344
        %v510 = vunpack.c.l.b16 %v345
        %v511 = vunpack.c.h.b16 %v345
        %v512 = vunpack.c.l.b16 %v346
        %v513 = vunpack.c.h.b16 %v346
        %v514 = vunpack.c.l.b16 %v347
        %v515 = vunpack.c.h.b16 %v347
        %v516 = vunpack.c.l.b16 %v348
        %v517 = vunpack.c.h.b16 %v348
        %v518 = vunpack.c.l.b16 %v349
        %v519 = vunpack.c.h.b16 %v349
        %v520 = vunpack.c.l.b16 %v350
        %v521 = vunpack.c.h.b16 %v350
        %v522 = vunpack.c.l.b16 %v351
        %v523 = vunpack.c.h.b16 %v351
        %v524 = vunpack.c.l.b16 %v352
        %v525 = vunpack.c.h.b16 %v352
        %v526 = vunpack.c.l.b16 %v353
        %v527 = vunpack.c.h.b16 %v353
        %v528 = vunpack.c.l.b16 %v354
        %v529 = vunpack.c.h.b16 %v354
        %v530 = vunpack.c.l.b16 %v355
        %v531 = vunpack.c.h.b16 %v355
        %v532 = vunpack.c.l.b16 %v356
        %v533 = vunpack.c.h.b16 %v356
        %v534 = vunpack.c.l.b16 %v357
        %v535 = vunpack.c.h.b16 %v357
        %v536 = vunpack.c.l.b16 %v358
        %v537 = vunpack.c.h.b16 %v358
        %v538 = vunpack.c.l.b16 %v359
        %v539 = vunpack.c.h.b16 %v359
        %v540 = vunpack.c.l.b16 %v360
        %v541 = vunpack.c.h.b16 %v360
        %v542 = vunpack.c.l.b16 %v361
        %v543 = vunpack.c.h.b16 %v361
        %v544 = vunpack.c.l.b16 %v362
        %v545 = vunpack.c.h.b16 %v362
        %v546 = vunpack.c.l.b16 %v363
        %v547 = vunpack.c.h.b16 %v363
        %v548 = vunpack.c.l.b16 %v364
        %v549 = vunpack.c.h.b16 %v364
        %v550 = vunpack.c.l.b16 %v365
        %v551 = vunpack.c.h.b16 %v365
        %v552 = vunpack.c.l.b16 %v366
        %v553 = vunpack.c.h.b16 %v366
        %v554 = vunpack.c.l.b16 %v367
        %v555 = vunpack.c.h.b16 %v367
        %v556 = vunpack.c.l.b16 %v368
        %v557 = vunpack.c.h.b16 %v368
        %v558 = vunpack.c.l.b16 %v369
        %v559 = vunpack.c.h.b16 %v369
        %v560 = vunpack.c.l.b16 %v370
        %v561 = vunpack.c.h.b16 %v370
        %v562 = vunpack.c.l.b16 %v371
        %v563 = vunpack.c.h.b16 %v371
        %v564 = vunpack.c.l.b16 %v372
        %v565 = vunpack.c.h.b16 %v372
        %v566 = vunpack.c.l.b16 %v373
        %v567 = vunpack.c.h.b16 %v373
        %v568 = vunpack.c.l.b16 %v374
        %v569 = vunpack.c.h.b16 %v374
        %v570 = vunpack.c.l.b16 %v375
        %v571 = vunpack.c.h.b16 %v375
        %v572 = vunpack.c.l.b16 %v376
        %v573 = vunpack.c.h.b16 %v376
        %v574 = vunpack.c.l.b16 %v377
        %v575 = vunpack.c.h.b16 %v377
        %v576 = vunpack.c.l.b16 %v378
        %v577 = vunpack.c.h.b16 %v378
        %v578 = vpack.c.b16 %v454, %v450
        %v579 = vpack.c.b16 %v455, %v451
        %v580 = vpack.c.b16 %v456, %v452
        %v581 = vpack.c.b16 %v457, %v453
        %v582 = vpack.c.b16 %v462, %v458
        %v583 = vpack.c.b16 %v463, %v459
        %v584 = vpack.c.b16 %v464, %v460
        %v585 = vpack.c.b16 %v465, %v461
        %v586 = vpack.c.b16 %v470, %v466
        %v587 = vpack.c.b16 %v471, %v467
        %v588 = vpack.c.b16 %v472, %v468
        %v589 = vpack.c.b16 %v473, %v469
        %v590 = vpack.c.b16 %v478, %v474
        %v591 = vpack.c.b16 %v479, %v475
        %v592 = vpack.c.b16 %v480, %v476
        %v593 = vpack.c.b16 %v481, %v477
        %v594 = vpack.c.b16 %v486, %v482
        %v595 = vpack.c.b16 %v487, %v483
        %v596 = vpack.c.b16 %v488, %v484
        %v597 = vpack.c.b16 %v489, %v485
        %v598 = vpack.c.b16 %v494, %v490
        %v599 = vpack.c.b16 %v495, %v491
        %v600 = vpack.c.b16 %v496, %v492
        %v601 = vpack.c.b16 %v497, %v493
        %v602 = vpack.c.b16 %v502, %v498
        %v603 = vpack.c.b16 %v503, %v499
        %v604 = vpack.c.b16 %v504, %v500
        %v605 = vpack.c.b16 %v505, %v501
        %v606 = vpack.c.b16 %v510, %v506
        %v607 = vpack.c.b16 %v511, %v507
        %v608 = vpack.c.b16 %v512, %v508
        %v609 = vpack.c.b16 %v513, %v509
        %v610 = vpack.c.b16 %v518, %v514
        %v611 = vpack.c.b16 %v519, %v515
        %v612 = vpack.c.b16 %v520, %v516
        %v613 = vpack.c.b16 %v521, %v517
        %v614 = vpack.c.b16 %v526, %v522
        %v615 = vpack.c.b16 %v527, %v523
        %v616 = vpack.c.b16 %v528, %v524
        %v617 = vpack.c.b16 %v529, %v525
        %v618 = vpack.c.b16 %v534, %v530
        %v619 = vpack.c.b16 %v535, %v531
        %v620 = vpack.c.b16 %v536, %v532
        %v621 = vpack.c.b16 %v537, %v533
        %v622 = vpack.c.b16 %v542, %v538
        %v623 = vpack.c.b16 %v543, %v539
        %v624 = vpack.c.b16 %v544, %v540
        %v625 = vpack.c.b16 %v545, %v541
        %v626 = vpack.c.b16 %v550, %v546
        %v627 = vpack.c.b16 %v551, %v547
        %v628 = vpack.c.b16 %v552, %v548
        %v629 = vpack.c.b16 %v553, %v549
        %v630 = vpack.c.b16 %v558, %v554
        %v631 = vpack.c.b16 %v559, %v555
        %v632 = vpack.c.b16 %v560, %v556
        %v633 = vpack.c.b16 %v561, %v557
        %v634 = vpack.c.b16 %v566, %v562
        %v635 = vpack.c.b16 %v567, %v563
        %v636 = vpack.c.b16 %v568, %v564
        %v637 = vpack.c.b16 %v569, %v565
        %v638 = vpack.c.b16 %v574, %v570
        %v639 = vpack.c.b16 %v575, %v571
        %v640 = vpack.c.b16 %v576, %v572
        %v641 = vpack.c.b16 %v577, %v573
        %706 = vmatpush.bf16.msra.mxu0 %v606
        %707 = vmatpush.bf16.msra.mxu0 %v602
        %708 = vmatpush.bf16.msra.mxu0 %v598
        %709 = vmatpush.bf16.msra.mxu0 %v594
        %710 = vmatpush.bf16.msra.mxu0 %v590
        %711 = vmatpush.bf16.msra.mxu0 %v586
        %712 = vmatpush.bf16.msra.mxu0 %v582
        %713 = vmatpush.bf16.msra.mxu0 %v578
        %714 = vmatmul.bf16.gmra.mxu0 %v382
        %v715 = vpop.f32.mrf.mxu0
        %v716 = vadd.f32 0.0, %v715
        %v717 = vpop.f32.mrf.mxu0
        %718 = vdwg.mxu0
        %719 = vmatpush.bf16.msra.mxu0 %v638
        %720 = vmatpush.bf16.msra.mxu0 %v634
        %721 = vmatpush.bf16.msra.mxu0 %v630
        %722 = vmatpush.bf16.msra.mxu0 %v626
        %723 = vmatpush.bf16.msra.mxu0 %v622
        %724 = vmatpush.bf16.msra.mxu0 %v618
        %725 = vmatpush.bf16.msra.mxu0 %v614
        %726 = vmatpush.bf16.msra.mxu0 %v610
        %727 = vmatmul.bf16.gmra.mxu0 %v383
        %v728 = vpop.f32.mrf.mxu0
        %v729 = vadd.f32 %v716, %v728
        %v730 = vpop.f32.mrf.mxu0
        %731 = vdwg.mxu0
        %732 = vmatpush.bf16.msra.mxu0 %v607
        %733 = vmatpush.bf16.msra.mxu0 %v603
        %734 = vmatpush.bf16.msra.mxu0 %v599
        %735 = vmatpush.bf16.msra.mxu0 %v595
        %736 = vmatpush.bf16.msra.mxu0 %v591
        %737 = vmatpush.bf16.msra.mxu0 %v587
        %738 = vmatpush.bf16.msra.mxu0 %v583
        %739 = vmatpush.bf16.msra.mxu0 %v579
        %740 = vmatmul.bf16.gmra.mxu0 %v382
        %v741 = vpop.f32.mrf.mxu0
        %v742 = vadd.f32 0.0, %v741
        %v743 = vpop.f32.mrf.mxu0
        %744 = vdwg.mxu0
        %745 = vmatpush.bf16.msra.mxu0 %v639
        %746 = vmatpush.bf16.msra.mxu0 %v635
        %747 = vmatpush.bf16.msra.mxu0 %v631
        %748 = vmatpush.bf16.msra.mxu0 %v627
        %749 = vmatpush.bf16.msra.mxu0 %v623
        %750 = vmatpush.bf16.msra.mxu0 %v619
        %751 = vmatpush.bf16.msra.mxu0 %v615
        %752 = vmatpush.bf16.msra.mxu0 %v611
        %753 = vmatmul.bf16.gmra.mxu0 %v383
        %v754 = vpop.f32.mrf.mxu0
        %v755 = vadd.f32 %v742, %v754
        %v756 = vpop.f32.mrf.mxu0
        %757 = vdwg.mxu0
        %758 = vmatpush.bf16.msra.mxu0 %v608
        %759 = vmatpush.bf16.msra.mxu0 %v604
        %760 = vmatpush.bf16.msra.mxu0 %v600
        %761 = vmatpush.bf16.msra.mxu0 %v596
        %762 = vmatpush.bf16.msra.mxu0 %v592
        %763 = vmatpush.bf16.msra.mxu0 %v588
        %764 = vmatpush.bf16.msra.mxu0 %v584
        %765 = vmatpush.bf16.msra.mxu0 %v580
        %766 = vmatmul.bf16.gmra.mxu0 %v382
        %v767 = vpop.f32.mrf.mxu0
        %v768 = vadd.f32 0.0, %v767
        %v769 = vpop.f32.mrf.mxu0
        %770 = vdwg.mxu0
        %771 = vmatpush.bf16.msra.mxu0 %v640
        %772 = vmatpush.bf16.msra.mxu0 %v636
        %773 = vmatpush.bf16.msra.mxu0 %v632
        %774 = vmatpush.bf16.msra.mxu0 %v628
        %775 = vmatpush.bf16.msra.mxu0 %v624
        %776 = vmatpush.bf16.msra.mxu0 %v620
        %777 = vmatpush.bf16.msra.mxu0 %v616
        %778 = vmatpush.bf16.msra.mxu0 %v612
        %779 = vmatmul.bf16.gmra.mxu0 %v383
        %v780 = vpop.f32.mrf.mxu0
        %v781 = vadd.f32 %v768, %v780
        %v782 = vpop.f32.mrf.mxu0
        %783 = vdwg.mxu0
        %784 = vmatpush.bf16.msra.mxu0 %v609
        %785 = vmatpush.bf16.msra.mxu0 %v605
        %786 = vmatpush.bf16.msra.mxu0 %v601
        %787 = vmatpush.bf16.msra.mxu0 %v597
        %788 = vmatpush.bf16.msra.mxu0 %v593
        %789 = vmatpush.bf16.msra.mxu0 %v589
        %790 = vmatpush.bf16.msra.mxu0 %v585
        %791 = vmatpush.bf16.msra.mxu0 %v581
        %792 = vmatmul.bf16.gmra.mxu0 %v382
        %v793 = vpop.f32.mrf.mxu0
        %v794 = vadd.f32 0.0, %v793
        %v795 = vpop.f32.mrf.mxu0
        %796 = vdwg.mxu0
        %797 = vmatpush.bf16.msra.mxu0 %v641
        %798 = vmatpush.bf16.msra.mxu0 %v637
        %799 = vmatpush.bf16.msra.mxu0 %v633
        %800 = vmatpush.bf16.msra.mxu0 %v629
        %801 = vmatpush.bf16.msra.mxu0 %v625
        %802 = vmatpush.bf16.msra.mxu0 %v621
        %803 = vmatpush.bf16.msra.mxu0 %v617
        %804 = vmatpush.bf16.msra.mxu0 %v613
        %805 = vmatmul.bf16.gmra.mxu0 %v383
        %v806 = vpop.f32.mrf.mxu0
        %v807 = vadd.f32 %v794, %v806
        %v808 = vpop.f32.mrf.mxu0
        %809 = vdwg.mxu0
        %v810 = vadd.f32 %v310, %v729
        %v811 = vadd.f32 %v311, %v755
        %v812 = vadd.f32 %v312, %v781
        %v813 = vadd.f32 %v313, %v807
        %814 = vst [vmem:[#allocation2] sm:$0xff] %v810
        %815 = vst [vmem:[#allocation2 + $0x8] sm:$0xff] %v811
        %816 = vst [vmem:[#allocation2 + $0x10] sm:$0xff] %v812
        %817 = vst [vmem:[#allocation2 + $0x18] sm:$0xff] %v813
        %p818 = scmp.eq.s32.totalorder %s30, 1
        // Predicated region
        $region49: #{tpu_custom_call.1} parent=31 // pred_check
          %p819 = pneg %p818
        $region50: #{tpu_custom_call.1} parent=31 // pred_check_branch
          %821 = sbr.rel (%p819) target = $region52
        $region51: #{tpu_custom_call.1} parent=31 // pred_region
          %v822 = vld [vmem:[#allocation2] sm:$0xff]
          %v823 = vld [vmem:[#allocation2 + $0x8] sm:$0xff]
          %v824 = vld [vmem:[#allocation2 + $0x10] sm:$0xff]
          %v825 = vld [vmem:[#allocation2 + $0x18] sm:$0xff]
          %v826 = vld [vmem:[%s263] sm:$0xf]
          %v828 = vperm.slane %v826, 0
          %v829 = vperm.slane %v826, 1
          %v830 = vperm.slane %v826, 2
          %v831 = vperm.slane %v826, 3
          %v836 = vadd.f32 %v822, %v828
          %v837 = vadd.f32 %v823, %v829
          %v838 = vadd.f32 %v824, %v830
          %v839 = vadd.f32 %v825, %v831
          %v840 = vmax.f32 %v836, 0.0
          %v841 = vmax.f32 %v837, 0.0
          %v842 = vmax.f32 %v838, 0.0
          %v843 = vmax.f32 %v839, 0.0
          %844 = vst [vmem:[%s296] sm:$0xff] %v840
          %845 = vst [vmem:[%s296 + $0x8] sm:$0xff] %v841
          %846 = vst [vmem:[%s296 + $0x10] sm:$0xff] %v842
          %847 = vst [vmem:[%s296 + $0x18] sm:$0xff] %v843
        $region52: #{tpu_custom_call.1} parent=31 // pred_fallthru
          _
        %s848 = sand.u32 %s134, 1
        %s849 = scalar_lea.sflag [#allocation5], %s848
        %s850 = sand.u32 %s134, 1
        %s851 = smul.addr %s850, 32
        %s852 = scalar_lea.vmem [#allocation9], %s851
        // Predicated region
        $region53: #{tpu_custom_call.1} parent=31 // pred_check
          %p853 = pneg %p144
        $region54: #{tpu_custom_call.1} parent=31 // pred_check_branch
          %855 = sbr.rel (%p853) target = $region56
        $region55: #{tpu_custom_call.1} parent=31 // pred_region
          %s856 = smul.u32 4, %s29
          %858 = vsyncadd %s849, 0
          %s859 = smul.addr %s28, 8
          %s860 = sadd.s32 %s856, %s859
          %s861 = smul.addr %s860, 8
          %s862 = scalar_lea.hbm %s3, %s861
          %s864 = sshll.u32 %s852, 4
          %s865 = int_to_ptr.vmem [resolvable:$true] %s864
          %s866 = sshll.u32 %s862, 4
          %s867 = int_to_ptr.hbm [resolvable:$true] %s866
          %869 = dma.vmem_to_hbm [thread:$0]  %s865, 512, %s867, %s849
        $region56: #{tpu_custom_call.1} parent=31 // pred_fallthru
          _
      $region32: #{tpu_custom_call.1} parent=5 // pred_fallthru
        _
      %p870 = scmp.le.s32.totalorder 2, %s18
      // Predicated region
      $region57: #{tpu_custom_call.1} parent=5 // pred_check
        %p871 = pneg %p870
      $region58: #{tpu_custom_call.1} parent=5 // pred_check_branch
        %873 = sbr.rel (%p871) target = $region60
      $region59: #{tpu_custom_call.1} parent=5 // pred_region
        %s874 = ssub.s32 %s18, 2
        // Predicated region
        $region61: #{tpu_custom_call.1} parent=59 // pred_check
          %p875 = pneg %p150
        $region62: #{tpu_custom_call.1} parent=59 // pred_check_branch
          %877 = sbr.rel (%p875) target = $region64
        $region63: #{tpu_custom_call.1} parent=59 // pred_region
          %s878 = sand.u32 %s135, 1
          %s879 = scalar_lea.sflag [#allocation5], %s878
          %s880 = sand.u32 %s135, 1
          %s881 = smul.addr %s880, 32
          %s882 = scalar_lea.vmem [#allocation9], %s881
          %884 = dma.done %s879, 512
        $region64: #{tpu_custom_call.1} parent=59 // pred_fallthru
          _
      $region60: #{tpu_custom_call.1} parent=5 // pred_fallthru
        _
    $region6: #{tpu_custom_call.1} parent=1 // loop_footer
      %s22 = sadd.s32 1, %s18
    $region7: #{tpu_custom_call.1} parent=1 // loop_footer_branch
      %17 = sbr.rel target = $region3
    $region8: #{tpu_custom_call.1} parent=1 // loop_exit
      _
    %885 = vsyncpa [#allocation4], 1
    %s886 = scalar_lea.sflag [#allocation4], 1
    %887 = vsyncpa %s886, 1
    %888 = vsyncpa [#allocation7], 1
    %s889 = scalar_lea.sflag [#allocation7], 1
    %890 = vsyncpa %s889, 1
    %891 = vsyncpa [#allocation5], 1
    %s892 = scalar_lea.sflag [#allocation5], 1
    %893 = vsyncpa %s892, 1

</llo_original>
